<compile_context>
chip_gen: v7x
topology: tpu7x:2x2x1
jax: 0.10.0
libtpu: 0.0.40
codegen_flags: <defaults>
</compile_context>

<pallas_src>
import functools

import jax
import jax.numpy as jnp
from jax.experimental import pallas as pl
from jax.experimental.pallas import tpu as pltpu

BN_EPS = 1e-5
_HIGH = jax.lax.Precision.HIGHEST
_VMEM_LIMIT = 48 * 1024 * 1024          # scoped VMEM limit for all pallas_calls
_WORKING_BUDGET = 24 * 1024 * 1024      # per-step double-buffered (x + out) tile budget
_FUSE_BYTES = 8 * 1024 * 1024           # fuse both passes if x3 + out3 fit under this
_FUSE_SLAB_BYTES = 1 * 1024 * 1024      # cap on a single (C, HW) f32 intermediate when fused


def _choose_tiling(hw, cin, cout, bytes_per_elem, working_budget=_WORKING_BUDGET):
    """Return (hw_pad, tile_hw): tile_hw is a multiple of 128 that divides hw_pad."""
    hw128 = ((hw + 127) // 128) * 128
    max_lanes = working_budget // (2 * (cin + cout) * bytes_per_elem)
    max_lanes = max(128, (max_lanes // 128) * 128)
    if hw128 <= max_lanes:
        return hw128, hw128
    q = hw128 // 128
    best = 1
    for d in range(1, q + 1):
        if q % d == 0 and d * 128 <= max_lanes:
            best = d
    return hw128, best * 128


# --------------------------- fused single-kernel path ---------------------------
def _fused_kernel(x_ref, w_ref, cb_ref, g_ref, b_ref, o_ref, *, use_bn):
    # x_ref: (N, Cin, HW)  w_ref: (Cout, Cin)  cb/g/b: (Cout, 1)  o_ref: (N, Cout, HW)
    n_batch, _, hw = x_ref.shape
    cout = w_ref.shape[0]
    w = w_ref[...]
    cb = cb_ref[...]

    # Phase 1: 1x1 conv (+ bias); stash y in the resident output block (VMEM).
    for n in range(n_batch):
        y = jnp.dot(w, x_ref[n], preferred_element_type=jnp.float32) + cb
        o_ref[n] = y.astype(o_ref.dtype)

    if use_bn:
        # Phase 2: per-output-channel batch statistics of y over (N, HW).
        ysum = jnp.zeros((cout, 1), jnp.float32)
        ysq = jnp.zeros((cout, 1), jnp.float32)
        for n in range(n_batch):
            y = o_ref[n].astype(jnp.float32)
            ysum = ysum + jnp.sum(y, axis=1, keepdims=True)
            ysq = ysq + jnp.sum(y * y, axis=1, keepdims=True)
        inv_m = 1.0 / float(n_batch * hw)
        mean = ysum * inv_m
        var = jnp.maximum(ysq * inv_m - mean * mean, 0.0)
        scale = g_ref[...] * jax.lax.rsqrt(var + BN_EPS)
        shift = b_ref[...] - mean * scale

    # Phase 3: normalize/affine + ReLU in place.
    for n in range(n_batch):
        y = o_ref[n].astype(jnp.float32)
        if use_bn:
            y = y * scale + shift
        o_ref[n] = jnp.maximum(y, 0.0).astype(o_ref.dtype)


# ----------------------- pass 1: x-moment accumulation -----------------------
def _stats_kernel(x_ref, xsum_ref, gram_ref):
    # x_ref: (Cin, T)   xsum_ref: (Cin, 1)   gram_ref: (Cin, Cin)  [per-batch partials]
    @pl.when(pl.program_id(1) == 0)
    def _init():
        xsum_ref[...] = jnp.zeros_like(xsum_ref)
        gram_ref[...] = jnp.zeros_like(gram_ref)

    x = x_ref[...]
    # Gram over the spatial axis (MXU; native dtype in, f32 accumulate).
    gram_ref[...] += jax.lax.dot_general(
        x, x,
        dimension_numbers=(((1,), (1,)), ((), ())),
        preferred_element_type=jnp.float32)
    # Per-channel sum over spatial (XLU lane reduce; overlaps the MXU op).
    xsum_ref[...] += jnp.sum(x.astype(jnp.float32), axis=1, keepdims=True)


# ------------------- pass 2: folded conv + bias + ReLU ------------------------
def _affine_relu_kernel(x_ref, w_ref, b_ref, o_ref):
    # x_ref: (Cin, T)   w_ref: (Cout, Cin)   b_ref: (Cout, 1)   o_ref: (Cout, T)
    y = jnp.dot(w_ref[...], x_ref[...], preferred_element_type=jnp.float32)
    y = y + b_ref[...]
    o_ref[...] = jnp.maximum(y, 0.0).astype(o_ref.dtype)


def _fold_bn(w, gram, xsum, gamma, beta, m, precision=None):
    """Fold training-mode BN stats (from x-moments) into 1x1-conv weight/bias.

    var_y = diag(W Gram W^T)/M - (W mean_x)^2, avoiding the explicit covariance.
    The conv bias cancels under training-mode BN: y - mean(y) = W (x - mean_x).
    """
    inv_m = 1.0 / m
    mean_x = xsum * inv_m                                              # (Cin, 1)
    u = jnp.dot(w, mean_x, preferred_element_type=jnp.float32,
                precision=precision)                                   # (Cout, 1)
    wg = jnp.dot(w, gram, preferred_element_type=jnp.float32,
                 precision=precision) * inv_m                          # (Cout, Cin)
    var_y = jnp.maximum(jnp.sum(wg * w, axis=1, keepdims=True) - u * u, 0.0)
    scale = gamma * jax.lax.rsqrt(var_y + BN_EPS)                      # (Cout, 1)
    return w * scale, beta - scale * u                                 # (Cout,Cin),(Cout,1)


def conv_bn_layer(x_nchw, conv_w, conv_b, bn_gamma, bn_beta, use_bn=True,
                  fuse_vmem_bytes=_FUSE_BYTES, working_vmem_bytes=_WORKING_BUDGET):
    """Forward of ConvBNLayer (training-mode BN).  x_nchw: (N,Cin,H,W); conv_w: (Cout,Cin)."""
    N, Cin, H, W = x_nchw.shape
    Cout = conv_w.shape[0]
    HW = H * W
    out_dtype = x_nchw.dtype

    x3 = x_nchw.reshape(N, Cin, HW)          # free reshape, stays NCHW-native
    w32 = conv_w.astype(jnp.float32)
    cb = conv_b.astype(jnp.float32).reshape(Cout, 1)
    g = bn_gamma.astype(jnp.float32).reshape(Cout, 1)
    b = bn_beta.astype(jnp.float32).reshape(Cout, 1)

    fused_bytes = N * HW * (Cin * x3.dtype.itemsize + Cout * x_nchw.dtype.itemsize)
    slab_bytes = HW * max(Cin, Cout) * 4
    if fused_bytes <= fuse_vmem_bytes and slab_bytes <= _FUSE_SLAB_BYTES:
        # ---------------- fused path: x read from HBM exactly once ----------------
        out3 = pl.pallas_call(
            functools.partial(_fused_kernel, use_bn=use_bn),
            out_shape=jax.ShapeDtypeStruct((N, Cout, HW), out_dtype),
            grid_spec=pltpu.PrefetchScalarGridSpec(
                num_scalar_prefetch=0,
                grid=(1,),
                in_specs=[pl.BlockSpec((N, Cin, HW), lambda i: (0, 0, 0)),
                          pl.BlockSpec((Cout, Cin), lambda i: (0, 0)),
                          pl.BlockSpec((Cout, 1), lambda i: (0, 0)),
                          pl.BlockSpec((Cout, 1), lambda i: (0, 0)),
                          pl.BlockSpec((Cout, 1), lambda i: (0, 0))],
                out_specs=pl.BlockSpec((N, Cout, HW), lambda i: (0, 0, 0))),
            compiler_params=pltpu.CompilerParams(
                dimension_semantics=("arbitrary",),
                vmem_limit_bytes=_VMEM_LIMIT),
        )(x3, w32, cb, g, b)
        return out3.reshape(N, Cout, H, W)

    # ---------------------------- two-pass tiled path ----------------------------
    hw_pad, tile_hw = _choose_tiling(HW, Cin, Cout, 4, working_vmem_bytes)
    if hw_pad != HW:
        # Zero padding: contributes nothing to sum(x)/x@x^T; padded output is sliced off.
        x3 = jnp.pad(x3, ((0, 0), (0, 0), (0, hw_pad - HW)))
    grid = (N, hw_pad // tile_hw)

    if use_bn:
        xsum_p, gram_p = pl.pallas_call(
            _stats_kernel,
            out_shape=(jax.ShapeDtypeStruct((N, Cin, 1), jnp.float32),
                       jax.ShapeDtypeStruct((N, Cin, Cin), jnp.float32)),
            grid_spec=pltpu.PrefetchScalarGridSpec(
                num_scalar_prefetch=0,
                grid=grid,
                in_specs=[pl.BlockSpec((None, Cin, tile_hw),
                                       lambda n, t: (n, 0, t))],
                out_specs=(pl.BlockSpec((None, Cin, 1), lambda n, t: (n, 0, 0)),
                           pl.BlockSpec((None, Cin, Cin), lambda n, t: (n, 0, 0)))),
            compiler_params=pltpu.CompilerParams(
                dimension_semantics=("parallel", "arbitrary"),
                vmem_limit_bytes=_VMEM_LIMIT),
        )(x3)
        gram = jnp.sum(gram_p, axis=0)
        xsum = jnp.sum(xsum_p, axis=0)
        # Normalize by the *true* element count (padding excluded by construction).
        w_eff, b_eff = _fold_bn(w32, gram, xsum, g, b, float(N * HW), precision=_HIGH)
    else:
        w_eff, b_eff = w32, cb

    out3 = pl.pallas_call(
        _affine_relu_kernel,
        out_shape=jax.ShapeDtypeStruct((N, Cout, hw_pad), out_dtype),
        grid_spec=pltpu.PrefetchScalarGridSpec(
            num_scalar_prefetch=0,
            grid=grid,
            in_specs=[pl.BlockSpec((None, Cin, tile_hw), lambda n, t: (n, 0, t)),
                      pl.BlockSpec((Cout, Cin), lambda n, t: (0, 0)),
                      pl.BlockSpec((Cout, 1), lambda n, t: (0, 0))],
            out_specs=pl.BlockSpec((None, Cout, tile_hw), lambda n, t: (n, 0, t))),
        compiler_params=pltpu.CompilerParams(
            dimension_semantics=("parallel", "parallel"),
            vmem_limit_bytes=_VMEM_LIMIT),
    )(x3, w_eff, b_eff)

    if hw_pad != HW:
        out3 = out3[:, :, :HW]
    return out3.reshape(N, Cout, H, W)


def reference(x_nchw, conv_w, conv_b, bn_gamma, bn_beta, use_bn=True):
    """Plain-JAX reference matching the PyTorch training-mode forward."""
    y = jnp.einsum("nchw,oc->nohw", x_nchw, conv_w,
                   precision=_HIGH) + conv_b[None, :, None, None]
    if use_bn:
        mean = jnp.mean(y, axis=(0, 2, 3), keepdims=True)
        var = jnp.mean((y - mean) ** 2, axis=(0, 2, 3), keepdims=True)
        y = (y - mean) * jax.lax.rsqrt(var + BN_EPS)
        y = y * bn_gamma[None, :, None, None] + bn_beta[None, :, None, None]
    return jnp.maximum(y, 0.0)


def _check(name, out, ref, atol=1e-4, rtol=1e-4):
    err = float(jnp.max(jnp.abs(out - ref)))
    assert jnp.allclose(out, ref, atol=atol, rtol=rtol), f"{name} mismatch, max err={err}"


if __name__ == "__main__":
    key = jax.random.PRNGKey(0)
    k_x, k_w, k_g, k_b, k_x2 = jax.random.split(key, 5)

    # Small shapes consistent with the module.
    N, Cin, H, W = 2, 4, 16, 16
    Cout = 8

    x = jax.random.normal(k_x, (N, Cin, H, W), jnp.float32)
    # conv1x1 init: weight ~ N(0, 0.01), bias = 0
    conv_w = 0.01 * jax.random.normal(k_w, (Cout, Cin), jnp.float32)
    conv_b = jnp.zeros((Cout,), jnp.float32)
    # BatchNorm2d init: weight ~ U(0, 1) (pytorch_ge12 path), bias = 0
    bn_gamma = jax.random.uniform(k_g, (Cout,), jnp.float32, 0.0, 1.0)
    bn_beta = jnp.zeros((Cout,), jnp.float32)

    ref_bn = reference(x, conv_w, conv_b, bn_gamma, bn_beta, use_bn=True)

    # 1) fused (activation fits in VMEM) path, training-mode BN.
    out = jax.block_until_ready(
        conv_bn_layer(x, conv_w, conv_b, bn_gamma, bn_beta, use_bn=True))
    assert out.shape == (N, Cout, H, W)
    _check("fused use_bn=True", out, ref_bn)

    # 2) force the two-pass tiled path (stats + affine kernels).
    out2 = jax.block_until_ready(
        conv_bn_layer(x, conv_w, conv_b, bn_gamma, bn_beta, use_bn=True,
                      fuse_vmem_bytes=0))
    _check("two-pass use_bn=True", out2, ref_bn)

    # 3) use_bn=False with a nonzero conv bias (fused path).
    conv_b2 = 0.1 * jax.random.normal(k_b, (Cout,), jnp.float32)
    out3 = jax.block_until_ready(
        conv_bn_layer(x, conv_w, conv_b2, bn_gamma, bn_beta, use_bn=False))
    _check("fused use_bn=False", out3,
           reference(x, conv_w, conv_b2, bn_gamma, bn_beta, use_bn=False))

    # 4) two-pass path with HW not a multiple of 128 (exercises zero-padding).
    Ho, Wo = 10, 10
    x_odd = jax.random.normal(k_x2, (N, Cin, Ho, Wo), jnp.float32)
    out4 = jax.block_until_ready(
        conv_bn_layer(x_odd, conv_w, conv_b, bn_gamma, bn_beta, use_bn=True,
                      fuse_vmem_bytes=0))
    _check("two-pass padded", out4,
           reference(x_odd, conv_w, conv_b, bn_gamma, bn_beta, use_bn=True))

    # 5) two-pass path without BN.
    out5 = jax.block_until_ready(
        conv_bn_layer(x, conv_w, conv_b2, bn_gamma, bn_beta, use_bn=False,
                      fuse_vmem_bytes=0))
    _check("two-pass use_bn=False", out5,
           reference(x, conv_w, conv_b2, bn_gamma, bn_beta, use_bn=False))

    print("KERNEL_OK")
</pallas_src>

<mosaic_0001>
module attributes {stable_mosaic.version = 11 : i64} {
  func.func @_fused_kernel(%arg0: i32, %arg1: memref<2x4x256xf32, #tpu.memory_space<vmem>>, %arg2: memref<8x4xf32, #tpu.memory_space<vmem>>, %arg3: memref<8x1xf32, #tpu.memory_space<vmem>>, %arg4: memref<8x1xf32, #tpu.memory_space<vmem>>, %arg5: memref<8x1xf32, #tpu.memory_space<vmem>>, %arg6: memref<2x8x256xf32, #tpu.memory_space<vmem>>) attributes {dimension_semantics = [#tpu.dimension_semantics<arbitrary>], iteration_bounds = array<i64: 1>, scalar_prefetch = 0 : i64, scratch_operands = 0 : i64, tpu.core_type = #tpu.core_type<tc>, window_params = [{pipeline_mode = #tpu.pipeline_mode<synchronous>, transform_indices = @transform_0, window_bounds = array<i64: 2, 4, 256>}, {pipeline_mode = #tpu.pipeline_mode<synchronous>, transform_indices = @transform_1, window_bounds = array<i64: 8, 4>}, {pipeline_mode = #tpu.pipeline_mode<synchronous>, transform_indices = @transform_2, window_bounds = array<i64: 8, 1>}, {pipeline_mode = #tpu.pipeline_mode<synchronous>, transform_indices = @transform_3, window_bounds = array<i64: 8, 1>}, {pipeline_mode = #tpu.pipeline_mode<synchronous>, transform_indices = @transform_4, window_bounds = array<i64: 8, 1>}, {pipeline_mode = #tpu.pipeline_mode<synchronous>, transform_indices = @transform_5, window_bounds = array<i64: 2, 8, 256>}]} {
    %c0 = arith.constant 0 : index
    %c0_0 = arith.constant 0 : index
    %0 = vector.load %arg2[%c0, %c0_0] : memref<8x4xf32, #tpu.memory_space<vmem>>, vector<8x4xf32>
    %c0_1 = arith.constant 0 : index
    %c0_2 = arith.constant 0 : index
    %1 = vector.load %arg3[%c0_1, %c0_2] : memref<8x1xf32, #tpu.memory_space<vmem>>, vector<8x1xf32>
    %c0_3 = arith.constant 0 : index
    %c0_4 = arith.constant 0 : index
    %c0_5 = arith.constant 0 : index
    %2 = vector.load %arg1[%c0_3, %c0_4, %c0_5] : memref<2x4x256xf32, #tpu.memory_space<vmem>>, vector<1x4x256xf32>
    %3 = vector.shape_cast %2 : vector<1x4x256xf32> to vector<4x256xf32>
    %cst = arith.constant dense<0.000000e+00> : vector<8x256xf32>
    %4 = tpu.matmul %0, %3, %cst {dimension_numbers = #tpu.dot_dimension_numbers<[1], [0], [0], [1], [0, 0, 1, 1], [], []>} : vector<8x4xf32>, vector<4x256xf32>, vector<8x256xf32> -> vector<8x256xf32>
    %5 = vector.broadcast %1 : vector<8x1xf32> to vector<8x256xf32>
    %6 = arith.addf %4, %5 : vector<8x256xf32>
    %c0_6 = arith.constant 0 : index
    %c0_7 = arith.constant 0 : index
    %c0_8 = arith.constant 0 : index
    %7 = vector.load %arg6[%c0_6, %c0_7, %c0_8] : memref<2x8x256xf32, #tpu.memory_space<vmem>>, vector<1x8x256xf32>
    %8 = vector.shape_cast %7 : vector<1x8x256xf32> to vector<8x256xf32>
    %9 = vector.shape_cast %6 : vector<8x256xf32> to vector<1x8x256xf32>
    tpu.vector_store %arg6[%c0_6, %c0_7, %c0_8], %9 {strides = array<i32>} : memref<2x8x256xf32, #tpu.memory_space<vmem>>, vector<1x8x256xf32>,
    %c1 = arith.constant 1 : index
    %c0_9 = arith.constant 0 : index
    %c0_10 = arith.constant 0 : index
    %10 = vector.load %arg1[%c1, %c0_9, %c0_10] : memref<2x4x256xf32, #tpu.memory_space<vmem>>, vector<1x4x256xf32>
    %11 = vector.shape_cast %10 : vector<1x4x256xf32> to vector<4x256xf32>
    %cst_11 = arith.constant dense<0.000000e+00> : vector<8x256xf32>
    %12 = tpu.matmul %0, %11, %cst_11 {dimension_numbers = #tpu.dot_dimension_numbers<[1], [0], [0], [1], [0, 0, 1, 1], [], []>} : vector<8x4xf32>, vector<4x256xf32>, vector<8x256xf32> -> vector<8x256xf32>
    %13 = vector.broadcast %1 : vector<8x1xf32> to vector<8x256xf32>
    %14 = arith.addf %12, %13 : vector<8x256xf32>
    %c1_12 = arith.constant 1 : index
    %c0_13 = arith.constant 0 : index
    %c0_14 = arith.constant 0 : index
    %15 = vector.load %arg6[%c1_12, %c0_13, %c0_14] : memref<2x8x256xf32, #tpu.memory_space<vmem>>, vector<1x8x256xf32>
    %16 = vector.shape_cast %15 : vector<1x8x256xf32> to vector<8x256xf32>
    %17 = vector.shape_cast %14 : vector<8x256xf32> to vector<1x8x256xf32>
    tpu.vector_store %arg6[%c1_12, %c0_13, %c0_14], %17 {strides = array<i32>} : memref<2x8x256xf32, #tpu.memory_space<vmem>>, vector<1x8x256xf32>,
    %cst_15 = arith.constant 0.000000e+00 : f32
    %18 = vector.broadcast %cst_15 : f32 to vector<8x1xf32>
    %cst_16 = arith.constant 0.000000e+00 : f32
    %19 = vector.broadcast %cst_16 : f32 to vector<8x1xf32>
    %c0_17 = arith.constant 0 : index
    %c0_18 = arith.constant 0 : index
    %c0_19 = arith.constant 0 : index
    %20 = vector.load %arg6[%c0_17, %c0_18, %c0_19] : memref<2x8x256xf32, #tpu.memory_space<vmem>>, vector<1x8x256xf32>
    %21 = vector.shape_cast %20 : vector<1x8x256xf32> to vector<8x256xf32>
    %cst_20 = arith.constant dense<0.000000e+00> : vector<8xf32>
    %22 = vector.multi_reduction <add>, %21, %cst_20 [1] : vector<8x256xf32> to vector<8xf32>
    %23 = vector.shape_cast %22 : vector<8xf32> to vector<8x1xf32>
    %24 = arith.addf %18, %23 : vector<8x1xf32>
    %25 = arith.mulf %21, %21 : vector<8x256xf32>
    %cst_21 = arith.constant dense<0.000000e+00> : vector<8xf32>
    %26 = vector.multi_reduction <add>, %25, %cst_21 [1] : vector<8x256xf32> to vector<8xf32>
    %27 = vector.shape_cast %26 : vector<8xf32> to vector<8x1xf32>
    %28 = arith.addf %19, %27 : vector<8x1xf32>
    %c1_22 = arith.constant 1 : index
    %c0_23 = arith.constant 0 : index
    %c0_24 = arith.constant 0 : index
    %29 = vector.load %arg6[%c1_22, %c0_23, %c0_24] : memref<2x8x256xf32, #tpu.memory_space<vmem>>, vector<1x8x256xf32>
    %30 = vector.shape_cast %29 : vector<1x8x256xf32> to vector<8x256xf32>
    %cst_25 = arith.constant dense<0.000000e+00> : vector<8xf32>
    %31 = vector.multi_reduction <add>, %30, %cst_25 [1] : vector<8x256xf32> to vector<8xf32>
    %32 = vector.shape_cast %31 : vector<8xf32> to vector<8x1xf32>
    %33 = arith.addf %24, %32 : vector<8x1xf32>
    %34 = arith.mulf %30, %30 : vector<8x256xf32>
    %cst_26 = arith.constant dense<0.000000e+00> : vector<8xf32>
    %35 = vector.multi_reduction <add>, %34, %cst_26 [1] : vector<8x256xf32> to vector<8xf32>
    %36 = vector.shape_cast %35 : vector<8xf32> to vector<8x1xf32>
    %37 = arith.addf %28, %36 : vector<8x1xf32>
    %cst_27 = arith.constant 0.001953125 : f32
    %38 = vector.broadcast %cst_27 : f32 to vector<8x1xf32>
    %39 = arith.mulf %33, %38 : vector<8x1xf32>
    %cst_28 = arith.constant 0.001953125 : f32
    %40 = vector.broadcast %cst_28 : f32 to vector<8x1xf32>
    %41 = arith.mulf %37, %40 : vector<8x1xf32>
    %42 = arith.mulf %39, %39 : vector<8x1xf32>
    %43 = arith.subf %41, %42 : vector<8x1xf32>
    %cst_29 = arith.constant 0.000000e+00 : f32
    %44 = vector.broadcast %cst_29 : f32 to vector<8x1xf32>
    %45 = arith.maximumf %43, %44 : vector<8x1xf32>
    %c0_30 = arith.constant 0 : index
    %c0_31 = arith.constant 0 : index
    %46 = vector.load %arg4[%c0_30, %c0_31] : memref<8x1xf32, #tpu.memory_space<vmem>>, vector<8x1xf32>
    %cst_32 = arith.constant 9.99999974E-6 : f32
    %47 = vector.broadcast %cst_32 : f32 to vector<8x1xf32>
    %48 = arith.addf %45, %47 : vector<8x1xf32>
    %49 = math.rsqrt %48 : vector<8x1xf32>
    %50 = arith.mulf %46, %49 : vector<8x1xf32>
    %c0_33 = arith.constant 0 : index
    %c0_34 = arith.constant 0 : index
    %51 = vector.load %arg5[%c0_33, %c0_34] : memref<8x1xf32, #tpu.memory_space<vmem>>, vector<8x1xf32>
    %52 = arith.mulf %39, %50 : vector<8x1xf32>
    %53 = arith.subf %51, %52 : vector<8x1xf32>
    %c0_35 = arith.constant 0 : index
    %c0_36 = arith.constant 0 : index
    %c0_37 = arith.constant 0 : index
    %54 = vector.load %arg6[%c0_35, %c0_36, %c0_37] : memref<2x8x256xf32, #tpu.memory_space<vmem>>, vector<1x8x256xf32>
    %55 = vector.shape_cast %54 : vector<1x8x256xf32> to vector<8x256xf32>
    %56 = vector.broadcast %50 : vector<8x1xf32> to vector<8x256xf32>
    %57 = arith.mulf %55, %56 : vector<8x256xf32>
    %58 = vector.broadcast %53 : vector<8x1xf32> to vector<8x256xf32>
    %59 = arith.addf %57, %58 : vector<8x256xf32>
    %cst_38 = arith.constant 0.000000e+00 : f32
    %60 = vector.broadcast %cst_38 : f32 to vector<8x256xf32>
    %61 = arith.maximumf %59, %60 : vector<8x256xf32>
    %c0_39 = arith.constant 0 : index
    %c0_40 = arith.constant 0 : index
    %c0_41 = arith.constant 0 : index
    %62 = vector.load %arg6[%c0_39, %c0_40, %c0_41] : memref<2x8x256xf32, #tpu.memory_space<vmem>>, vector<1x8x256xf32>
    %63 = vector.shape_cast %62 : vector<1x8x256xf32> to vector<8x256xf32>
    %64 = vector.shape_cast %61 : vector<8x256xf32> to vector<1x8x256xf32>
    tpu.vector_store %arg6[%c0_39, %c0_40, %c0_41], %64 {strides = array<i32>} : memref<2x8x256xf32, #tpu.memory_space<vmem>>, vector<1x8x256xf32>,
    %c1_42 = arith.constant 1 : index
    %c0_43 = arith.constant 0 : index
    %c0_44 = arith.constant 0 : index
    %65 = vector.load %arg6[%c1_42, %c0_43, %c0_44] : memref<2x8x256xf32, #tpu.memory_space<vmem>>, vector<1x8x256xf32>
    %66 = vector.shape_cast %65 : vector<1x8x256xf32> to vector<8x256xf32>
    %67 = vector.broadcast %50 : vector<8x1xf32> to vector<8x256xf32>
    %68 = arith.mulf %66, %67 : vector<8x256xf32>
    %69 = vector.broadcast %53 : vector<8x1xf32> to vector<8x256xf32>
    %70 = arith.addf %68, %69 : vector<8x256xf32>
    %cst_45 = arith.constant 0.000000e+00 : f32
    %71 = vector.broadcast %cst_45 : f32 to vector<8x256xf32>
    %72 = arith.maximumf %70, %71 : vector<8x256xf32>
    %c1_46 = arith.constant 1 : index
    %c0_47 = arith.constant 0 : index
    %c0_48 = arith.constant 0 : index
    %73 = vector.load %arg6[%c1_46, %c0_47, %c0_48] : memref<2x8x256xf32, #tpu.memory_space<vmem>>, vector<1x8x256xf32>
    %74 = vector.shape_cast %73 : vector<1x8x256xf32> to vector<8x256xf32>
    %75 = vector.shape_cast %72 : vector<8x256xf32> to vector<1x8x256xf32>
    tpu.vector_store %arg6[%c1_46, %c0_47, %c0_48], %75 {strides = array<i32>} : memref<2x8x256xf32, #tpu.memory_space<vmem>>, vector<1x8x256xf32>,
    return
  }
  func.func @transform_0(%arg0: i32) -> (i32, i32, i32) {
    %c0_i32 = arith.constant 0 : i32
    %c0_i32_0 = arith.constant 0 : i32
    %c0_i32_1 = arith.constant 0 : i32
    %c0_i32_2 = arith.constant 0 : i32
    return %c0_i32, %c0_i32_0, %c0_i32_1 : i32, i32, i32
  }
  func.func @transform_1(%arg0: i32) -> (i32, i32) {
    %c0_i32 = arith.constant 0 : i32
    %c0_i32_0 = arith.constant 0 : i32
    %c0_i32_1 = arith.constant 0 : i32
    return %c0_i32, %c0_i32_0 : i32, i32
  }
  func.func @transform_2(%arg0: i32) -> (i32, i32) {
    %c0_i32 = arith.constant 0 : i32
    %c0_i32_0 = arith.constant 0 : i32
    %c0_i32_1 = arith.constant 0 : i32
    return %c0_i32, %c0_i32_0 : i32, i32
  }
  func.func @transform_3(%arg0: i32) -> (i32, i32) {
    %c0_i32 = arith.constant 0 : i32
    %c0_i32_0 = arith.constant 0 : i32
    %c0_i32_1 = arith.constant 0 : i32
    return %c0_i32, %c0_i32_0 : i32, i32
  }
  func.func @transform_4(%arg0: i32) -> (i32, i32) {
    %c0_i32 = arith.constant 0 : i32
    %c0_i32_0 = arith.constant 0 : i32
    %c0_i32_1 = arith.constant 0 : i32
    return %c0_i32, %c0_i32_0 : i32, i32
  }
  func.func @transform_5(%arg0: i32) -> (i32, i32, i32) {
    %c0_i32 = arith.constant 0 : i32
    %c0_i32_0 = arith.constant 0 : i32
    %c0_i32_1 = arith.constant 0 : i32
    %c0_i32_2 = arith.constant 0 : i32
    return %c0_i32, %c0_i32_0, %c0_i32_1 : i32, i32, i32
  }
}

</mosaic_0001>

<llo_original>
// kernel: tpu_custom_call.1
$region0: #{tpu_custom_call.1}
  #allocation0 [shape = 'u32[]', space=smem, size = 0x4, offset = 0x4, fixed_abs, tag = 'smem constant byte address 0x4 - core index']
  #allocation1 [shape = 'u32[144,128]{1,0:T(1,128)}', space=vmem, size = 0x12000, scoped, tag = 'internal scratch']
  %s0 = inlined_call_operand.vmem [shape: f32[2,4,256], index: 0, kind: input, shape index: {}]
  %s1 = inlined_call_operand.vmem [shape: f32[8,4], index: 1, kind: input, shape index: {}]
  %s2 = inlined_call_operand.vmem [shape: f32[8,1], index: 2, kind: input, shape index: {}]
  %s3 = inlined_call_operand.vmem [shape: f32[8,1], index: 3, kind: input, shape index: {}]
  %s4 = inlined_call_operand.vmem [shape: f32[8,1], index: 4, kind: input, shape index: {}]
  %s5 = inlined_call_operand.hbm [shape: f32[2,8,256], index: 5, kind: output, shape index: {}]
  %s6 = sld [smem:[#allocation0]]
  $region30: #{tpu_custom_call.1} parent=0
    _
  %s8 = ssub.s32 1, %s6
  %s9 = scalar_select 0, %s8, %s6
  $region1: #{tpu_custom_call.1} parent=0
    #allocation2 [shape = 'u8[16384]{0}', space=vmem, size = 0x4000, scoped, tag = 'output window, operand 0, single buffered']
    #allocation3 [shape = 's32[1]{0}', space=sflag, size = 0x4, scoped, tag = 'scoped memory for tpu_custom_call.1']
    %10 = vsyncpa [#allocation3], 0
    // Predicated region
    $region2: #{tpu_custom_call.1} parent=1 // pred_check
      _
    $region3: #{tpu_custom_call.1} parent=1 // pred_check_branch
      %12 = sbr.rel (0) target = $region5
    $region4: #{tpu_custom_call.1} parent=1 // pred_region
      _
    $region5: #{tpu_custom_call.1} parent=1 // pred_fallthru
      _
    // Predicated region
    $region6: #{tpu_custom_call.1} parent=1 // pred_check
      _
    $region7: #{tpu_custom_call.1} parent=1 // pred_check_branch
      %14 = sbr.rel (0) target = $region9
    $region8: #{tpu_custom_call.1} parent=1 // pred_region
      _
    $region9: #{tpu_custom_call.1} parent=1 // pred_fallthru
      _
    // Predicated region
    $region10: #{tpu_custom_call.1} parent=1 // pred_check
      _
    $region11: #{tpu_custom_call.1} parent=1 // pred_check_branch
      %16 = sbr.rel (0) target = $region13
    $region12: #{tpu_custom_call.1} parent=1 // pred_region
      _
    $region13: #{tpu_custom_call.1} parent=1 // pred_fallthru
      _
    // Predicated region
    $region14: #{tpu_custom_call.1} parent=1 // pred_check
      _
    $region15: #{tpu_custom_call.1} parent=1 // pred_check_branch
      %18 = sbr.rel (0) target = $region17
    $region16: #{tpu_custom_call.1} parent=1 // pred_region
      _
    $region17: #{tpu_custom_call.1} parent=1 // pred_fallthru
      _
    // Predicated region
    $region18: #{tpu_custom_call.1} parent=1 // pred_check
      _
    $region19: #{tpu_custom_call.1} parent=1 // pred_check_branch
      %20 = sbr.rel (0) target = $region21
    $region20: #{tpu_custom_call.1} parent=1 // pred_region
      _
    $region21: #{tpu_custom_call.1} parent=1 // pred_fallthru
      _
    %v21 = vld [vmem:[%s1] sm:$0xff]
    %v22 = vld [vmem:[%s2] sm:$0xff]
    %v23 = vld [vmem:[%s0] sm:$0xff]
    %25 = vset.pattern.permute.xlu0 0
    %26 = vperm.xlu0 %25, %v22
    %v27 = vpop.permute.xlu0 %26
    %v30 = vcombine.high %v23, %v23
    %vm31 = vcmask 31744
    %v33 = vsel %vm31, %v21, 0
    %vm35 = vcmask 1043456
    %v36 = vsel %vm35, %v23, 0
    %v38 = vsel %vm35, %v30, 0
    %40 = vmatprep.subr.mxu0 %v38
    %41 = vmatpush1.msra.mxu0 %v36
    %42 = vmatprep.subr.mxu0 0.0
    %43 = vmatpush1.msra.mxu0 0.0
    %44 = vmatprep.subr.mxu0 0.0
    %45 = vmatpush1.msra.mxu0 0.0
    %46 = vmatprep.subr.mxu0 0.0
    %47 = vmatpush1.msra.mxu0 0.0
    %48 = vmatprep.subr.mxu0 0.0
    %49 = vmatpush1.msra.mxu0 0.0
    %50 = vmatprep.subr.mxu0 0.0
    %51 = vmatpush1.msra.mxu0 0.0
    %52 = vmatprep.subr.mxu0 0.0
    %53 = vmatpush1.msra.mxu0 0.0
    %54 = vmatprep.subr.mxu0 0.0
    %55 = vmatpush1.msra.mxu0 0.0
    %56 = vmatprep.subr.mxu0 0.0
    %57 = vmatpush1.msra.mxu0 0.0
    %58 = vmatprep.subr.mxu0 0.0
    %59 = vmatpush1.msra.mxu0 0.0
    %60 = vmatprep.subr.mxu0 0.0
    %61 = vmatpush1.msra.mxu0 0.0
    %62 = vmatprep.subr.mxu0 0.0
    %63 = vmatpush1.msra.mxu0 0.0
    %64 = vmatprep.subr.mxu0 0.0
    %65 = vmatpush1.msra.mxu0 0.0
    %66 = vmatprep.subr.mxu0 0.0
    %67 = vmatpush1.msra.mxu0 0.0
    %68 = vmatprep.subr.mxu0 0.0
    %69 = vmatpush1.msra.mxu0 0.0
    %70 = vmatprep.subr.mxu0 0.0
    %71 = vmatpush1.msra.mxu0 0.0
    %72 = vmatprep.subr.mxu0 0.0
    %73 = vmatpush1.msra.mxu0 0.0
    %74 = vmatprep.subr.mxu0 0.0
    %75 = vmatpush1.msra.mxu0 0.0
    %76 = vmatprep.subr.mxu0 0.0
    %77 = vmatpush1.msra.mxu0 0.0
    %78 = vmatprep.subr.mxu0 0.0
    %79 = vmatpush1.msra.mxu0 0.0
    %80 = vmatprep.subr.mxu0 0.0
    %81 = vmatpush1.msra.mxu0 0.0
    %82 = vmatprep.subr.mxu0 0.0
    %83 = vmatpush1.msra.mxu0 0.0
    %84 = vmatprep.subr.mxu0 0.0
    %85 = vmatpush1.msra.mxu0 0.0
    %86 = vmatprep.subr.mxu0 0.0
    %87 = vmatpush1.msra.mxu0 0.0
    %88 = vmatprep.subr.mxu0 0.0
    %89 = vmatpush1.msra.mxu0 0.0
    %90 = vmatprep.subr.mxu0 0.0
    %91 = vmatpush1.msra.mxu0 0.0
    %92 = vmatprep.subr.mxu0 0.0
    %93 = vmatpush1.msra.mxu0 0.0
    %94 = vmatprep.subr.mxu0 0.0
    %95 = vmatpush1.msra.mxu0 0.0
    %96 = vmatprep.subr.mxu0 0.0
    %97 = vmatpush1.msra.mxu0 0.0
    %98 = vmatprep.subr.mxu0 0.0
    %99 = vmatpush1.msra.mxu0 0.0
    %100 = vmatprep.subr.mxu0 0.0
    %101 = vmatpush1.msra.mxu0 0.0
    %102 = vmatprep.subr.mxu0 0.0
    %103 = vmatpush1.msra.mxu0 0.0
    %104 = vmatprep.mubr.f32.mxu0 0.0
    %105 = vmatmul.mubr.f32.gmra.mrb[0].mxu0 %v33
    %v106 = vpop.f32.mrb[0].mxu0
    %v107 = vadd.f32 %v27, %v106
    %v108 = vpop.f32.mrb[0].mxu0
    %v109 = vadd.f32 %v27, %v108
    %110 = vdwg.mxu0
    %111 = vst [vmem:[#allocation2] sm:$0xff] %v107
    %112 = vst [vmem:[#allocation2 + $0x8] sm:$0xff] %v109
    %s113 = scalar_lea.vmem %s0, 8
    %v114 = vld [vmem:[%s113] sm:$0xff]
    %v116 = vcombine.high %v114, %v114
    %v117 = vsel %vm35, %v114, 0
    %v119 = vsel %vm35, %v116, 0
    %121 = vmatprep.subr.mxu0 %v119
    %122 = vmatpush1.msra.mxu0 %v117
    %123 = vmatprep.subr.mxu0 0.0
    %124 = vmatpush1.msra.mxu0 0.0
    %125 = vmatprep.subr.mxu0 0.0
    %126 = vmatpush1.msra.mxu0 0.0
    %127 = vmatprep.subr.mxu0 0.0
    %128 = vmatpush1.msra.mxu0 0.0
    %129 = vmatprep.subr.mxu0 0.0
    %130 = vmatpush1.msra.mxu0 0.0
    %131 = vmatprep.subr.mxu0 0.0
    %132 = vmatpush1.msra.mxu0 0.0
    %133 = vmatprep.subr.mxu0 0.0
    %134 = vmatpush1.msra.mxu0 0.0
    %135 = vmatprep.subr.mxu0 0.0
    %136 = vmatpush1.msra.mxu0 0.0
    %137 = vmatprep.subr.mxu0 0.0
    %138 = vmatpush1.msra.mxu0 0.0
    %139 = vmatprep.subr.mxu0 0.0
    %140 = vmatpush1.msra.mxu0 0.0
    %141 = vmatprep.subr.mxu0 0.0
    %142 = vmatpush1.msra.mxu0 0.0
    %143 = vmatprep.subr.mxu0 0.0
    %144 = vmatpush1.msra.mxu0 0.0
    %145 = vmatprep.subr.mxu0 0.0
    %146 = vmatpush1.msra.mxu0 0.0
    %147 = vmatprep.subr.mxu0 0.0
    %148 = vmatpush1.msra.mxu0 0.0
    %149 = vmatprep.subr.mxu0 0.0
    %150 = vmatpush1.msra.mxu0 0.0
    %151 = vmatprep.subr.mxu0 0.0
    %152 = vmatpush1.msra.mxu0 0.0
    %153 = vmatprep.subr.mxu0 0.0
    %154 = vmatpush1.msra.mxu0 0.0
    %155 = vmatprep.subr.mxu0 0.0
    %156 = vmatpush1.msra.mxu0 0.0
    %157 = vmatprep.subr.mxu0 0.0
    %158 = vmatpush1.msra.mxu0 0.0
    %159 = vmatprep.subr.mxu0 0.0
    %160 = vmatpush1.msra.mxu0 0.0
    %161 = vmatprep.subr.mxu0 0.0
    %162 = vmatpush1.msra.mxu0 0.0
    %163 = vmatprep.subr.mxu0 0.0
    %164 = vmatpush1.msra.mxu0 0.0
    %165 = vmatprep.subr.mxu0 0.0
    %166 = vmatpush1.msra.mxu0 0.0
    %167 = vmatprep.subr.mxu0 0.0
    %168 = vmatpush1.msra.mxu0 0.0
    %169 = vmatprep.subr.mxu0 0.0
    %170 = vmatpush1.msra.mxu0 0.0
    %171 = vmatprep.subr.mxu0 0.0
    %172 = vmatpush1.msra.mxu0 0.0
    %173 = vmatprep.subr.mxu0 0.0
    %174 = vmatpush1.msra.mxu0 0.0
    %175 = vmatprep.subr.mxu0 0.0
    %176 = vmatpush1.msra.mxu0 0.0
    %177 = vmatprep.subr.mxu0 0.0
    %178 = vmatpush1.msra.mxu0 0.0
    %179 = vmatprep.subr.mxu0 0.0
    %180 = vmatpush1.msra.mxu0 0.0
    %181 = vmatprep.subr.mxu0 0.0
    %182 = vmatpush1.msra.mxu0 0.0
    %183 = vmatprep.subr.mxu0 0.0
    %184 = vmatpush1.msra.mxu0 0.0
    %185 = vmatprep.mubr.f32.mxu0 0.0
    %186 = vmatmul.mubr.f32.gmra.mrb[0].mxu0 %v33
    %v187 = vpop.f32.mrb[0].mxu0
    %v188 = vadd.f32 %v27, %v187
    %v189 = vpop.f32.mrb[0].mxu0
    %v190 = vadd.f32 %v27, %v189
    %191 = vdwg.mxu0
    %s192 = scalar_lea.vmem [#allocation2], 16
    %193 = vst [vmem:[%s192] sm:$0xff] %v188
    %194 = vst [vmem:[%s192 + $0x8] sm:$0xff] %v190
    %v195 = vld [vmem:[#allocation2] sm:$0xff]
    %v196 = vld [vmem:[#allocation2 + $0x8] sm:$0xff]
    %v197 = vadd.f32 %v195, %v196
    %198 = vadd.xlane.f32.xlu0 %v197
    %v199 = vpop.xlane.xlu0 %198
    %v200 = vadd.f32 %v199, 0.0
    %v201 = vmul.f32 %v195, %v195
    %v202 = vmul.f32 %v196, %v196
    %v203 = vadd.f32 %v201, %v202
    %204 = vadd.xlane.f32.xlu0 %v203
    %v205 = vpop.xlane.xlu0 %204
    %v206 = vadd.f32 %v205, 0.0
    %v207 = vld [vmem:[%s192] sm:$0xff]
    %v208 = vld [vmem:[%s192 + $0x8] sm:$0xff]
    %v209 = vadd.f32 %v207, %v208
    %210 = vadd.xlane.f32.xlu0 %v209
    %v211 = vpop.xlane.xlu0 %210
    %v212 = vadd.f32 %v200, %v211
    %v213 = vmul.f32 %v207, %v207
    %v214 = vmul.f32 %v208, %v208
    %v215 = vadd.f32 %v213, %v214
    %216 = vadd.xlane.f32.xlu0 %v215
    %v217 = vpop.xlane.xlu0 %216
    %v218 = vadd.f32 %v206, %v217
    %v219 = vmul.f32 %v212, 0.001953125
    %v220 = vmul.f32 %v218, 0.001953125
    %v221 = vmul.f32 %v219, %v219
    %v222 = vsub.f32 %v220, %v221
    %v223 = vmax.f32 %v222, 0.0
    %v224 = vld [vmem:[%s3] sm:$0xff]
    %v225 = vadd.f32 %v223, 1e-05
    %v226 = vrsqrt.pop %v225
    %v227 = vmul.f32 %v224, %v226
    %v228 = vld [vmem:[%s4] sm:$0xff]
    %v229 = vmul.f32 %v219, %v227
    %v230 = vsub.f32 %v228, %v229
    %232 = vset.pattern.permute.xlu0 0
    %233 = vperm.xlu0 %232, %v227
    %v234 = vpop.permute.xlu0 %233
    %v236 = vmul.f32 %v195, %v234
    %v237 = vmul.f32 %v196, %v234
    %239 = vset.pattern.permute.xlu0 0
    %240 = vperm.xlu0 %239, %v230
    %v241 = vpop.permute.xlu0 %240
    %v243 = vadd.f32 %v236, %v241
    %v244 = vadd.f32 %v237, %v241
    %v245 = vmax.f32 %v243, 0.0
    %v246 = vmax.f32 %v244, 0.0
    %247 = vst [vmem:[#allocation2] sm:$0xff] %v245
    %248 = vst [vmem:[#allocation2 + $0x8] sm:$0xff] %v246
    %v249 = vld [vmem:[%s192] sm:$0xff]
    %v250 = vld [vmem:[%s192 + $0x8] sm:$0xff]
    %v251 = vmul.f32 %v249, %v234
    %v252 = vmul.f32 %v250, %v234
    %v253 = vadd.f32 %v251, %v241
    %v254 = vadd.f32 %v252, %v241
    %v255 = vmax.f32 %v253, 0.0
    %v256 = vmax.f32 %v254, 0.0
    %257 = vst [vmem:[%s192] sm:$0xff] %v255
    %258 = vst [vmem:[%s192 + $0x8] sm:$0xff] %v256
    // Predicated region
    $region22: #{tpu_custom_call.1} parent=1 // pred_check
      _
    $region23: #{tpu_custom_call.1} parent=1 // pred_check_branch
      %260 = sbr.rel (0) target = $region25
    $region24: #{tpu_custom_call.1} parent=1 // pred_region
      %s262 = ssub.s32 512, 512
      %263 = vsyncadd [#allocation3], %s262
      %s264 = sshll.u32 [#allocation2], 4
      %s265 = int_to_ptr.vmem [resolvable:$true] %s264
      %270 = dma.vmem_to_hbm [thread:$0]  %s265, 512, %s5, [#allocation3], 256, 256, 16
    $region25: #{tpu_custom_call.1} parent=1 // pred_fallthru
      _
    // Predicated region
    $region26: #{tpu_custom_call.1} parent=1 // pred_check
      _
    $region27: #{tpu_custom_call.1} parent=1 // pred_check_branch
      %272 = sbr.rel (0) target = $region29
    $region28: #{tpu_custom_call.1} parent=1 // pred_region
      %273 = dma.done [#allocation3], 512
    $region29: #{tpu_custom_call.1} parent=1 // pred_fallthru
      _
    %274 = vsyncpa [#allocation3], 1

</llo_original>
